<compile_context>
chip_gen: v6e
topology: v6e:2x2x1
jax: 0.10.0
libtpu: 0.0.40
codegen_flags: <defaults>
</compile_context>

<pallas_src>
import functools

import jax
import jax.numpy as jnp
from jax.experimental import pallas as pl
from jax.experimental.pallas import tpu as pltpu


def _round_up(v, m):
    return -(-v // m) * m


# ----------------------------------------------------------------------------
# Pallas kernel: fused complex-as-real MLP on one (row tile, channel group).
#   x_ref : (tile_m, 2*Cgp)   [xr_g | xi_g]   (compute dtype: bf16 or f32)
#   w*_ref: (2*Cgp, 2*Cgp)    [[Wr, Wi], [-Wi, Wr]] for this group's diagonal blocks
#   b*_ref: (1, 2*Cgp)        [br_g | bi_g]  (f32)
#   o_ref : (tile_m, 2*Cgp)   [or_g | oi_g]  (f32)
# ----------------------------------------------------------------------------
def _afno_mlp_kernel(x_ref, w1_ref, b1_ref, w2_ref, b2_ref, o_ref, *, lam):
    # Layer 1: complex block-diag matmul (one real MXU matmul) + bias + ReLU (f32).
    h = jnp.dot(x_ref[...], w1_ref[...], preferred_element_type=jnp.float32)
    h = jnp.maximum(h + b1_ref[...], 0.0)

    # Layer 2.
    o = jnp.dot(h.astype(w2_ref.dtype), w2_ref[...],
                preferred_element_type=jnp.float32)
    o = o + b2_ref[...]

    # Softshrink in f32.  softshrink(0) == 0, so the wrapper's mode slicing and channel
    # zero-padding are exactly equivalent to the reference's masking -- no per-tile mask work.
    # NOTE: ragged-tail grid steps read OOB (garbage) input rows; safe because the MLP is
    # strictly row-wise and Pallas masks the OOB output writes.
    o_ref[...] = jnp.where(o > lam, o - lam, jnp.where(o < -lam, o + lam, 0.0))


# ----------------------------------------------------------------------------
# Parameter preparation (one-time; hoisted out of the hot path).
# ----------------------------------------------------------------------------
def _pick_group_size(num_blocks, block_size):
    """Group diagonal blocks so each group's padded lane width 2*Cgp is a multiple of 128,
    choosing the grouping with minimum total MXU MACs (ties -> smallest group)."""
    best_gsz, best_cost = num_blocks, None
    for gsz in range(1, num_blocks + 1):
        if num_blocks % gsz:
            continue
        cgp = _round_up(gsz * block_size, 64)            # 2*Cgp multiple of 128
        cost = (num_blocks // gsz) * cgp * cgp           # MACs per layer per row
        if best_cost is None or cost < best_cost:
            best_cost, best_gsz = cost, gsz
    return best_gsz


def prepare_afno_params(params, *, compute_dtype=jnp.bfloat16, group_size=None):
    """Build per-group fused real-embedding weights/biases once per parameter set."""
    w1, b1, w2, b2 = params['w1'], params['b1'], params['w2'], params['b2']
    num_blocks, block_size = w1.shape[1], w1.shape[2]
    gsz = group_size if group_size is not None else _pick_group_size(num_blocks, block_size)
    assert num_blocks % gsz == 0, "group_size must divide num_blocks"
    G = num_blocks // gsz
    Cg = gsz * block_size
    Cgp = _round_up(Cg, 64)                              # lane-dense: 2*Cgp % 128 == 0
    # TODO(synk): for extremely large per-group widths the (2*Cgp)^2 weight tile could exceed
    # VMEM; a further split of the group's output channels would be needed there.

    def block_diag_group(w, g):
        m = jax.scipy.linalg.block_diag(*[w[b] for b in range(g * gsz, (g + 1) * gsz)])
        return jnp.pad(m, ((0, Cgp - Cg), (0, Cgp - Cg)))

    def fuse(w, b):
        Ws, Bs = [], []
        for g in range(G):
            wr = block_diag_group(w[0], g).astype(jnp.float32)
            wi = block_diag_group(w[1], g).astype(jnp.float32)
            Wg = jnp.concatenate(
                [jnp.concatenate([wr, wi], axis=1),
                 jnp.concatenate([-wi, wr], axis=1)], axis=0)        # (2Cgp, 2Cgp)
            br = jnp.pad(b[0, g * gsz:(g + 1) * gsz].reshape(-1), (0, Cgp - Cg))
            bi = jnp.pad(b[1, g * gsz:(g + 1) * gsz].reshape(-1), (0, Cgp - Cg))
            Ws.append(Wg)
            Bs.append(jnp.concatenate([br, bi]))
        W = jnp.stack(Ws).astype(compute_dtype)                      # (G, 2Cgp, 2Cgp)
        B = jnp.stack(Bs).reshape(G, 1, 2 * Cgp).astype(jnp.float32)  # (G, 1, 2Cgp)
        return W, B

    W1, B1 = fuse(w1, b1)
    W2, B2 = fuse(w2, b2)
    return dict(W1=W1, B1=B1, W2=W2, B2=B2,
                num_blocks=num_blocks, block_size=block_size,
                group_size=gsz, num_groups=G,
                group_channels=Cg, group_channels_padded=Cgp)


# ----------------------------------------------------------------------------
# VMEM-aware tile-size selection (generation aware: 128 MiB on v5e/v6e, 64 MiB on v7x).
# ----------------------------------------------------------------------------
def _vmem_capacity_bytes():
    try:
        cap = getattr(pltpu.get_tpu_info(), 'vmem_capacity_bytes', None)
        if cap:
            return int(cap)
    except Exception:
        pass
    return 64 * 1024 * 1024        # conservative default (v7x per-core VMEM)


def _pick_tile_m(M, two_cgp, itemsize, num_groups, vmem_cap):
    budget = int(vmem_cap * 0.6)                         # headroom for compiler scratch
    # weights: per-group tiles, 2 layers x 2 pipeline buffers (double-buffering kept so the
    # next group's weight DMA overlaps compute; only re-issued once per group on the outer axis)
    weight_bytes = 2 * 2 * two_cgp * two_cgp * itemsize
    # per row: x tile (2 bufs) + f32 out tile (2 bufs) + f32 intermediates (h, pre-shrink o)
    per_row = two_cgp * (2 * itemsize + 2 * 4 + 2 * 4)
    avail = max(budget - weight_bytes, 1 << 20)
    cap = 1024 if vmem_cap >= (96 << 20) else 512        # v5e/v6e vs v7x
    tm = int(min(cap, avail // per_row))
    for gran in (256, 128, 32, 8):                       # MXU-friendly row granularity
        if tm >= gran:
            tm = (tm // gran) * gran
            break
    tm = max(8, tm)
    tm = min(tm, _round_up(M, 8))                        # don't exceed the problem
    # v7x megacore: keep >=2 grid steps so both TensorCores get work on large problems.
    if num_groups == 1 and M > 512:
        tm = min(tm, _round_up(-(-M // 2), 256))
    return tm


# ----------------------------------------------------------------------------
# Wrapper: rfft -> Pallas fused group-tiled MLP kernel -> irfft -> residual add.
# ----------------------------------------------------------------------------
def afno1d_mixing(x, fused, *, sparsity_threshold=0.01,
                  hard_thresholding_fraction=1.0, tile_m=None):
    B, S, C = x.shape
    in_dtype = x.dtype
    bias = x
    total_modes = S // 2 + 1
    kept = int(total_modes * hard_thresholding_fraction)
    if kept <= 0:
        # Every mode is hard-thresholded: softshrink(0)=0, irfft(0)=0 -> output == bias.
        return x

    G = fused['num_groups']
    Cg = fused['group_channels']
    Cgp = fused['group_channels_padded']
    two_cgp = 2 * Cgp
    W1, B1, W2, B2 = fused['W1'], fused['B1'], fused['W2'], fused['B2']
    assert C == fused['num_blocks'] * fused['block_size'], "channel mismatch with params"

    # TODO(synk): rfft/irfft have no Pallas TPU primitive; they stay in XLA.
    xf = jnp.fft.rfft(x.astype(jnp.float32), axis=1, norm='ortho')[:, :kept]   # (B, kept, C)
    M = B * kept

    # Group-major, lane-dense layout: each group's [xr_g | xi_g] is one 2*Cgp lane slab.
    xr = jnp.real(xf).reshape(M, G, Cg)
    xi = jnp.imag(xf).reshape(M, G, Cg)
    if Cgp > Cg:
        pad = ((0, 0), (0, 0), (0, Cgp - Cg))
        xr, xi = jnp.pad(xr, pad), jnp.pad(xi, pad)
    # TODO(synk): this concat is an extra XLA-side copy; passing xr/xi as two separate kernel
    # inputs with W split into top/bottom halves would remove it when Cgp % 128 == 0.
    X = jnp.concatenate([xr, xi], axis=-1)                 # (M, G, 2Cgp)
    X = jnp.transpose(X, (1, 0, 2)).astype(W1.dtype)       # (G, M, 2Cgp)

    vmem_cap = _vmem_capacity_bytes()
    if tile_m is None:
        tile_m = _pick_tile_m(M, two_cgp, W1.dtype.itemsize, G, vmem_cap)
    # Group axis OUTER: the per-group weight block index only changes once per group,
    # so its DMA is re-issued G times total (row tiles stream underneath it).
    grid = (G, pl.cdiv(M, tile_m))

    row_spec = pl.BlockSpec((None, tile_m, two_cgp), lambda g, i: (g, i, 0))
    w_spec = pl.BlockSpec((None, two_cgp, two_cgp), lambda g, i: (g, 0, 0))
    b_spec = pl.BlockSpec((None, 1, two_cgp), lambda g, i: (g, 0, 0))

    out = pl.pallas_call(
        functools.partial(_afno_mlp_kernel, lam=float(sparsity_threshold)),
        out_shape=jax.ShapeDtypeStruct((G, M, two_cgp), jnp.float32),
        grid=grid,
        in_specs=[row_spec, w_spec, b_spec, w_spec, b_spec],
        out_specs=row_spec,
        compiler_params=pltpu.CompilerParams(
            dimension_semantics=("parallel", "parallel"),
            vmem_limit_bytes=min(int(vmem_cap * 0.85), vmem_cap - (8 << 20))),
    )(X, W1, B1, W2, B2)

    out = jnp.transpose(out, (1, 0, 2))                    # (M, G, 2Cgp)
    o_r = out[..., :Cg].reshape(B, kept, C)                # drop padded channels
    o_i = out[..., Cgp:Cgp + Cg].reshape(B, kept, C)
    of = jax.lax.complex(o_r, o_i)
    if kept < total_modes:
        of = jnp.pad(of, ((0, 0), (0, total_modes - kept), (0, 0)))
    y = jnp.fft.irfft(of, n=S, axis=1, norm='ortho').astype(in_dtype)
    return y + bias


# ----------------------------------------------------------------------------
# Pure-JAX reference (mirrors the PyTorch forward) for correctness checks.
# ----------------------------------------------------------------------------
def afno1d_mixing_ref(x, params, *, num_blocks, sparsity_threshold=0.01,
                      hard_thresholding_fraction=1.0):
    B, S, C = x.shape
    dtype = x.dtype
    bias = x
    bs = C // num_blocks
    total_modes = S // 2 + 1
    kept = int(total_modes * hard_thresholding_fraction)

    xf = jnp.fft.rfft(x.astype(jnp.float32), axis=1, norm='ortho')
    xf = xf.reshape(B, total_modes, num_blocks, bs)
    w1, b1, w2, b2 = params['w1'], params['b1'], params['w2'], params['b2']

    mul = lambda inp, w: jnp.einsum('...bd,bdk->...bk', inp, w)
    xr, xi = jnp.real(xf), jnp.imag(xf)

    h_r = jax.nn.relu(mul(xr, w1[0]) - mul(xi, w1[1]) + b1[0])
    h_i = jax.nn.relu(mul(xi, w1[0]) + mul(xr, w1[1]) + b1[1])
    o_r = mul(h_r, w2[0]) - mul(h_i, w2[1]) + b2[0]
    o_i = mul(h_r, w2[1]) + mul(h_i, w2[0]) + b2[1]

    mode = jnp.arange(total_modes)[None, :, None, None]
    keep = mode < kept
    o_r = jnp.where(keep, o_r, 0.0)
    o_i = jnp.where(keep, o_i, 0.0)

    lam = sparsity_threshold
    ss = lambda v: jnp.where(v > lam, v - lam, jnp.where(v < -lam, v + lam, 0.0))
    o_r, o_i = ss(o_r), ss(o_i)

    of = jax.lax.complex(o_r, o_i).reshape(B, total_modes, C)
    y = jnp.fft.irfft(of, n=S, axis=1, norm='ortho').astype(dtype)
    return y + bias


# ----------------------------------------------------------------------------
# Main
# ----------------------------------------------------------------------------
if __name__ == "__main__":
    B, S, C = 2, 16, 32
    num_blocks = 8
    block_size = C // num_blocks
    scale = 0.02

    key = jax.random.PRNGKey(0)
    kx, k1, k2, k3, k4 = jax.random.split(key, 5)

    x = jax.random.normal(kx, (B, S, C), dtype=jnp.float32)
    params = {
        'w1': scale * jax.random.normal(k1, (2, num_blocks, block_size, block_size), jnp.float32),
        'b1': scale * jax.random.normal(k2, (2, num_blocks, block_size), jnp.float32),
        'w2': scale * jax.random.normal(k3, (2, num_blocks, block_size, block_size), jnp.float32),
        'b2': scale * jax.random.normal(k4, (2, num_blocks, block_size), jnp.float32),
    }

    ref = jax.block_until_ready(afno1d_mixing_ref(x, params, num_blocks=num_blocks))

    # 1) f32 compute, auto group size: tight check vs the pure-JAX reference.
    fused_f32 = prepare_afno_params(params, compute_dtype=jnp.float32)
    out = jax.block_until_ready(afno1d_mixing(x, fused_f32))
    assert out.shape == (B, S, C)
    assert jnp.allclose(out, ref, atol=1e-5, rtol=1e-5), "f32 mismatch vs reference"

    # 2) explicit multi-group path (exercises the grid axis over channel-block groups).
    fused_grp = prepare_afno_params(params, compute_dtype=jnp.float32, group_size=2)
    out_grp = jax.block_until_ready(afno1d_mixing(x, fused_grp))
    assert jnp.allclose(out_grp, ref, atol=1e-5, rtol=1e-5), "grouped mismatch vs reference"

    # 3) hard-thresholding path (kept_modes < total_modes -> modes sliced pre-kernel).
    out_ht = jax.block_until_ready(
        afno1d_mixing(x, fused_f32, hard_thresholding_fraction=0.5))
    ref_ht = jax.block_until_ready(
        afno1d_mixing_ref(x, params, num_blocks=num_blocks,
                          hard_thresholding_fraction=0.5))
    assert jnp.allclose(out_ht, ref_ht, atol=1e-5, rtol=1e-5), "hard-threshold mismatch"

    # 4) default bf16 MXU path (f32 accumulation; bias/ReLU/softshrink stay in f32).
    fused_bf16 = prepare_afno_params(params)               # compute_dtype defaults to bf16
    out_bf16 = jax.block_until_ready(afno1d_mixing(x, fused_bf16))
    assert jnp.allclose(out_bf16, ref, atol=2e-2, rtol=0.0), "bf16 mismatch vs reference"

    print("KERNEL_OK")
</pallas_src>

<mosaic_0001>
module attributes {stable_mosaic.version = 11 : i64} {
  func.func @_afno_mlp_kernel(%arg0: i32, %arg1: i32, %arg2: memref<1x24x128xf32, #tpu.memory_space<vmem>>, %arg3: memref<1x128x128xf32, #tpu.memory_space<vmem>>, %arg4: memref<1x1x128xf32, #tpu.memory_space<vmem>>, %arg5: memref<1x128x128xf32, #tpu.memory_space<vmem>>, %arg6: memref<1x1x128xf32, #tpu.memory_space<vmem>>, %arg7: memref<1x24x128xf32, #tpu.memory_space<vmem>>) attributes {dimension_semantics = [#tpu.dimension_semantics<parallel>, #tpu.dimension_semantics<parallel>], iteration_bounds = array<i64: 1, 1>, scalar_prefetch = 0 : i64, scratch_operands = 0 : i64, tpu.core_type = #tpu.core_type<tc>, window_params = [{transform_indices = @transform_0, window_bounds = array<i64: 1, 24, 128>}, {transform_indices = @transform_1, window_bounds = array<i64: 1, 128, 128>}, {transform_indices = @transform_2, window_bounds = array<i64: 1, 1, 128>}, {transform_indices = @transform_3, window_bounds = array<i64: 1, 128, 128>}, {transform_indices = @transform_4, window_bounds = array<i64: 1, 1, 128>}, {transform_indices = @transform_5, window_bounds = array<i64: 1, 24, 128>}]} {
    %c0 = arith.constant 0 : index
    %c0_0 = arith.constant 0 : index
    %c0_1 = arith.constant 0 : index
    %0 = vector.load %arg2[%c0, %c0_0, %c0_1] : memref<1x24x128xf32, #tpu.memory_space<vmem>>, vector<1x24x128xf32>
    %1 = vector.shape_cast %0 : vector<1x24x128xf32> to vector<24x128xf32>
    %c0_2 = arith.constant 0 : index
    %c0_3 = arith.constant 0 : index
    %c0_4 = arith.constant 0 : index
    %2 = vector.load %arg3[%c0_2, %c0_3, %c0_4] : memref<1x128x128xf32, #tpu.memory_space<vmem>>, vector<1x128x128xf32>
    %3 = vector.shape_cast %2 : vector<1x128x128xf32> to vector<128x128xf32>
    %cst = arith.constant dense<0.000000e+00> : vector<24x128xf32>
    %4 = tpu.matmul %1, %3, %cst {dimension_numbers = #tpu.dot_dimension_numbers<[1], [0], [0], [1], [0, 0, 1, 1], [], []>} : vector<24x128xf32>, vector<128x128xf32>, vector<24x128xf32> -> vector<24x128xf32>
    %c0_5 = arith.constant 0 : index
    %c0_6 = arith.constant 0 : index
    %c0_7 = arith.constant 0 : index
    %5 = vector.load %arg4[%c0_5, %c0_6, %c0_7] : memref<1x1x128xf32, #tpu.memory_space<vmem>>, vector<1x1x128xf32>
    %6 = vector.shape_cast %5 : vector<1x1x128xf32> to vector<1x128xf32>
    %7 = vector.broadcast %6 : vector<1x128xf32> to vector<24x128xf32>
    %8 = arith.addf %4, %7 : vector<24x128xf32>
    %cst_8 = arith.constant 0.000000e+00 : f32
    %9 = vector.broadcast %cst_8 : f32 to vector<24x128xf32>
    %10 = arith.maximumf %8, %9 : vector<24x128xf32>
    %c0_9 = arith.constant 0 : index
    %c0_10 = arith.constant 0 : index
    %c0_11 = arith.constant 0 : index
    %11 = vector.load %arg5[%c0_9, %c0_10, %c0_11] : memref<1x128x128xf32, #tpu.memory_space<vmem>>, vector<1x128x128xf32>
    %12 = vector.shape_cast %11 : vector<1x128x128xf32> to vector<128x128xf32>
    %cst_12 = arith.constant dense<0.000000e+00> : vector<24x128xf32>
    %13 = tpu.matmul %10, %12, %cst_12 {dimension_numbers = #tpu.dot_dimension_numbers<[1], [0], [0], [1], [0, 0, 1, 1], [], []>} : vector<24x128xf32>, vector<128x128xf32>, vector<24x128xf32> -> vector<24x128xf32>
    %c0_13 = arith.constant 0 : index
    %c0_14 = arith.constant 0 : index
    %c0_15 = arith.constant 0 : index
    %14 = vector.load %arg6[%c0_13, %c0_14, %c0_15] : memref<1x1x128xf32, #tpu.memory_space<vmem>>, vector<1x1x128xf32>
    %15 = vector.shape_cast %14 : vector<1x1x128xf32> to vector<1x128xf32>
    %16 = vector.broadcast %15 : vector<1x128xf32> to vector<24x128xf32>
    %17 = arith.addf %13, %16 : vector<24x128xf32>
    %cst_16 = arith.constant 0.00999999977 : f32
    %18 = vector.broadcast %cst_16 : f32 to vector<24x128xf32>
    %19 = arith.cmpf ogt, %17, %18 : vector<24x128xf32>
    %cst_17 = arith.constant 0.00999999977 : f32
    %20 = vector.broadcast %cst_17 : f32 to vector<24x128xf32>
    %21 = arith.subf %17, %20 : vector<24x128xf32>
    %cst_18 = arith.constant -0.00999999977 : f32
    %22 = vector.broadcast %cst_18 : f32 to vector<24x128xf32>
    %23 = arith.cmpf olt, %17, %22 : vector<24x128xf32>
    %cst_19 = arith.constant 0.00999999977 : f32
    %24 = vector.broadcast %cst_19 : f32 to vector<24x128xf32>
    %25 = arith.addf %17, %24 : vector<24x128xf32>
    %cst_20 = arith.constant 0.000000e+00 : f32
    %26 = vector.broadcast %cst_20 : f32 to vector<24x128xf32>
    %27 = arith.select %23, %25, %26 : vector<24x128xi1>, vector<24x128xf32>
    %28 = arith.select %19, %21, %27 : vector<24x128xi1>, vector<24x128xf32>
    %c0_21 = arith.constant 0 : index
    %c0_22 = arith.constant 0 : index
    %c0_23 = arith.constant 0 : index
    %29 = vector.load %arg7[%c0_21, %c0_22, %c0_23] : memref<1x24x128xf32, #tpu.memory_space<vmem>>, vector<1x24x128xf32>
    %30 = vector.shape_cast %29 : vector<1x24x128xf32> to vector<24x128xf32>
    %31 = vector.shape_cast %28 : vector<24x128xf32> to vector<1x24x128xf32>
    tpu.vector_store %arg7[%c0_21, %c0_22, %c0_23], %31 {strides = array<i32>} : memref<1x24x128xf32, #tpu.memory_space<vmem>>, vector<1x24x128xf32>,
    return
  }
  func.func @transform_0(%arg0: i32, %arg1: i32) -> (i32, i32, i32) {
    %c0_i32 = arith.constant 0 : i32
    %c0_i32_0 = arith.constant 0 : i32
    return %arg0, %arg1, %c0_i32 : i32, i32, i32
  }
  func.func @transform_1(%arg0: i32, %arg1: i32) -> (i32, i32, i32) {
    %c0_i32 = arith.constant 0 : i32
    %c0_i32_0 = arith.constant 0 : i32
    %c0_i32_1 = arith.constant 0 : i32
    return %arg0, %c0_i32, %c0_i32_0 : i32, i32, i32
  }
  func.func @transform_2(%arg0: i32, %arg1: i32) -> (i32, i32, i32) {
    %c0_i32 = arith.constant 0 : i32
    %c0_i32_0 = arith.constant 0 : i32
    %c0_i32_1 = arith.constant 0 : i32
    return %arg0, %c0_i32, %c0_i32_0 : i32, i32, i32
  }
  func.func @transform_3(%arg0: i32, %arg1: i32) -> (i32, i32, i32) {
    %c0_i32 = arith.constant 0 : i32
    %c0_i32_0 = arith.constant 0 : i32
    %c0_i32_1 = arith.constant 0 : i32
    return %arg0, %c0_i32, %c0_i32_0 : i32, i32, i32
  }
  func.func @transform_4(%arg0: i32, %arg1: i32) -> (i32, i32, i32) {
    %c0_i32 = arith.constant 0 : i32
    %c0_i32_0 = arith.constant 0 : i32
    %c0_i32_1 = arith.constant 0 : i32
    return %arg0, %c0_i32, %c0_i32_0 : i32, i32, i32
  }
  func.func @transform_5(%arg0: i32, %arg1: i32) -> (i32, i32, i32) {
    %c0_i32 = arith.constant 0 : i32
    %c0_i32_0 = arith.constant 0 : i32
    return %arg0, %arg1, %c0_i32 : i32, i32, i32
  }
}

</mosaic_0001>

<llo_original>
// kernel: tpu_custom_call.1
$region0: #{tpu_custom_call.1}
  #allocation0 [shape = 'u32[]', space=smem, size = 0x4, offset = 0x4, fixed_abs, tag = 'smem constant byte address 0x4 - core index']
  #allocation1 [shape = 'u32[144,128]{1,0:T(1,128)}', space=vmem, size = 0x12000, scoped, tag = 'internal scratch']
  %s0 = inlined_call_operand.vmem [shape: f32[1,18,128], index: 0, kind: input, shape index: {}]
  %s1 = inlined_call_operand.hbm [shape: f32[1,128,128], index: 1, kind: input, shape index: {}]
  %s2 = inlined_call_operand.vmem [shape: f32[1,1,128], index: 2, kind: input, shape index: {}]
  %s3 = inlined_call_operand.hbm [shape: f32[1,128,128], index: 3, kind: input, shape index: {}]
  %s4 = inlined_call_operand.vmem [shape: f32[1,1,128], index: 4, kind: input, shape index: {}]
  %s5 = inlined_call_operand.vmem [shape: f32[1,18,128], index: 5, kind: output, shape index: {}]
  %s6 = sld [smem:[#allocation0]]
  $region38: #{tpu_custom_call.1} parent=0
    _
  %s8 = ssub.s32 1, %s6
  %s9 = scalar_select 0, %s8, %s6
  $region1: #{tpu_custom_call.1} parent=0
    #allocation2 [shape = 'u8[65536]{0}', space=vmem, size = 0x10000, scoped, tag = 'input window, operand 1, single buffered']
    #allocation3 [shape = 's32[1]{0}', space=sflag, size = 0x4, scoped, tag = 'scoped memory for tpu_custom_call.1']
    #allocation4 [shape = 'u8[65536]{0}', space=vmem, size = 0x10000, scoped, tag = 'input window, operand 3, single buffered']
    #allocation5 [shape = 's32[1]{0}', space=sflag, size = 0x4, scoped, tag = 'scoped memory for tpu_custom_call.1']
    %10 = vsyncpa [#allocation3], 0
    %11 = vsyncpa [#allocation5], 0
    // Predicated region
    $region2: #{tpu_custom_call.1} parent=1 // pred_check
      _
    $region3: #{tpu_custom_call.1} parent=1 // pred_check_branch
      %13 = sbr.rel (0) target = $region5
    $region4: #{tpu_custom_call.1} parent=1 // pred_region
      _
    $region5: #{tpu_custom_call.1} parent=1 // pred_fallthru
      _
    // Predicated region
    $region6: #{tpu_custom_call.1} parent=1 // pred_check
      _
    $region7: #{tpu_custom_call.1} parent=1 // pred_check_branch
      %15 = sbr.rel (0) target = $region9
    $region8: #{tpu_custom_call.1} parent=1 // pred_region
      %s17 = ssub.s32 2048, 2048
      %18 = vsyncadd [#allocation3], %s17
      %s19 = sshll.u32 [#allocation2], 4
      %s20 = int_to_ptr.vmem [resolvable:$true] %s19
      %25 = dma.hbm_to_vmem [thread:$0]  %s1, 2048, %s20, [#allocation3], 128, 128, 8
    $region9: #{tpu_custom_call.1} parent=1 // pred_fallthru
      _
    // Predicated region
    $region10: #{tpu_custom_call.1} parent=1 // pred_check
      _
    $region11: #{tpu_custom_call.1} parent=1 // pred_check_branch
      %27 = sbr.rel (0) target = $region13
    $region12: #{tpu_custom_call.1} parent=1 // pred_region
      _
    $region13: #{tpu_custom_call.1} parent=1 // pred_fallthru
      _
    // Predicated region
    $region14: #{tpu_custom_call.1} parent=1 // pred_check
      _
    $region15: #{tpu_custom_call.1} parent=1 // pred_check_branch
      %29 = sbr.rel (0) target = $region17
    $region16: #{tpu_custom_call.1} parent=1 // pred_region
      %s31 = ssub.s32 2048, 2048
      %32 = vsyncadd [#allocation5], %s31
      %s33 = sshll.u32 [#allocation4], 4
      %s34 = int_to_ptr.vmem [resolvable:$true] %s33
      %39 = dma.hbm_to_vmem [thread:$0]  %s3, 2048, %s34, [#allocation5], 128, 128, 8
    $region17: #{tpu_custom_call.1} parent=1 // pred_fallthru
      _
    // Predicated region
    $region18: #{tpu_custom_call.1} parent=1 // pred_check
      _
    $region19: #{tpu_custom_call.1} parent=1 // pred_check_branch
      %41 = sbr.rel (0) target = $region21
    $region20: #{tpu_custom_call.1} parent=1 // pred_region
      _
    $region21: #{tpu_custom_call.1} parent=1 // pred_fallthru
      _
    // Predicated region
    $region22: #{tpu_custom_call.1} parent=1 // pred_check
      _
    $region23: #{tpu_custom_call.1} parent=1 // pred_check_branch
      %43 = sbr.rel (0) target = $region25
    $region24: #{tpu_custom_call.1} parent=1 // pred_region
      %44 = dma.done [#allocation3], 2048
    $region25: #{tpu_custom_call.1} parent=1 // pred_fallthru
      _
    // Predicated region
    $region26: #{tpu_custom_call.1} parent=1 // pred_check
      _
    $region27: #{tpu_custom_call.1} parent=1 // pred_check_branch
      %46 = sbr.rel (0) target = $region29
    $region28: #{tpu_custom_call.1} parent=1 // pred_region
      %47 = dma.done [#allocation5], 2048
    $region29: #{tpu_custom_call.1} parent=1 // pred_fallthru
      _
    %v48 = vld [vmem:[%s0] sm:$0xff]
    %v49 = vld [vmem:[%s0 + $0x8] sm:$0xff]
    %v50 = vld [vmem:[%s0 + $0x10] sm:$0xff]
    %v51 = vld [vmem:[#allocation2] sm:$0xff]
    %v52 = vld [vmem:[#allocation2 + $0x8] sm:$0xff]
    %v53 = vld [vmem:[#allocation2 + $0x10] sm:$0xff]
    %v54 = vld [vmem:[#allocation2 + $0x18] sm:$0xff]
    %v55 = vld [vmem:[#allocation2 + $0x20] sm:$0xff]
    %v56 = vld [vmem:[#allocation2 + $0x28] sm:$0xff]
    %v57 = vld [vmem:[#allocation2 + $0x30] sm:$0xff]
    %v58 = vld [vmem:[#allocation2 + $0x38] sm:$0xff]
    %v59 = vld [vmem:[#allocation2 + $0x40] sm:$0xff]
    %v60 = vld [vmem:[#allocation2 + $0x48] sm:$0xff]
    %v61 = vld [vmem:[#allocation2 + $0x50] sm:$0xff]
    %v62 = vld [vmem:[#allocation2 + $0x58] sm:$0xff]
    %v63 = vld [vmem:[#allocation2 + $0x60] sm:$0xff]
    %v64 = vld [vmem:[#allocation2 + $0x68] sm:$0xff]
    %v65 = vld [vmem:[#allocation2 + $0x70] sm:$0xff]
    %v66 = vld [vmem:[#allocation2 + $0x78] sm:$0xff]
    %v67 = vld [vmem:[%s2] sm:$0x1]
    %v69 = vlaneseq
    %v70 = vshrl.u32 %v69, 7
    %v71 = vsub.s32 0, %v70
    %v72 = vrot.slane %v67, %v71
    %74 = vmatprep.subr.mxu0 0.0
    %75 = vmatpush1.msra.mxu0 %v66
    %76 = vmatprep.subr.mxu0 0.0
    %77 = vmatpush1.msra.mxu0 %v65
    %78 = vmatprep.subr.mxu0 0.0
    %79 = vmatpush1.msra.mxu0 %v64
    %80 = vmatprep.subr.mxu0 0.0
    %81 = vmatpush1.msra.mxu0 %v63
    %82 = vmatprep.subr.mxu0 0.0
    %83 = vmatpush1.msra.mxu0 %v62
    %84 = vmatprep.subr.mxu0 0.0
    %85 = vmatpush1.msra.mxu0 %v61
    %86 = vmatprep.subr.mxu0 0.0
    %87 = vmatpush1.msra.mxu0 %v60
    %88 = vmatprep.subr.mxu0 0.0
    %89 = vmatpush1.msra.mxu0 %v59
    %90 = vmatprep.subr.mxu0 0.0
    %91 = vmatpush1.msra.mxu0 %v58
    %92 = vmatprep.subr.mxu0 0.0
    %93 = vmatpush1.msra.mxu0 %v57
    %94 = vmatprep.subr.mxu0 0.0
    %95 = vmatpush1.msra.mxu0 %v56
    %96 = vmatprep.subr.mxu0 0.0
    %97 = vmatpush1.msra.mxu0 %v55
    %98 = vmatprep.subr.mxu0 0.0
    %99 = vmatpush1.msra.mxu0 %v54
    %100 = vmatprep.subr.mxu0 0.0
    %101 = vmatpush1.msra.mxu0 %v53
    %102 = vmatprep.subr.mxu0 0.0
    %103 = vmatpush1.msra.mxu0 %v52
    %104 = vmatprep.subr.mxu0 0.0
    %105 = vmatpush1.msra.mxu0 %v51
    %106 = vmatprep.subr.mxu0 0.0
    %107 = vmatpush2.msra.mxu0 0.0
    %108 = vmatprep.subr.mxu0 0.0
    %109 = vmatpush2.msra.mxu0 0.0
    %110 = vmatprep.subr.mxu0 0.0
    %111 = vmatpush2.msra.mxu0 0.0
    %112 = vmatprep.subr.mxu0 0.0
    %113 = vmatpush2.msra.mxu0 0.0
    %114 = vmatprep.subr.mxu0 0.0
    %115 = vmatpush2.msra.mxu0 0.0
    %116 = vmatprep.subr.mxu0 0.0
    %117 = vmatpush2.msra.mxu0 0.0
    %118 = vmatprep.subr.mxu0 0.0
    %119 = vmatpush2.msra.mxu0 0.0
    %120 = vmatprep.subr.mxu0 0.0
    %121 = vmatpush2.msra.mxu0 0.0
    %122 = vmatprep.subr.mxu0 0.0
    %123 = vmatpush2.msra.mxu0 0.0
    %124 = vmatprep.subr.mxu0 0.0
    %125 = vmatpush2.msra.mxu0 0.0
    %126 = vmatprep.subr.mxu0 0.0
    %127 = vmatpush2.msra.mxu0 0.0
    %128 = vmatprep.subr.mxu0 0.0
    %129 = vmatpush2.msra.mxu0 0.0
    %130 = vmatprep.subr.mxu0 0.0
    %131 = vmatpush2.msra.mxu0 0.0
    %132 = vmatprep.subr.mxu0 0.0
    %133 = vmatpush2.msra.mxu0 0.0
    %134 = vmatprep.subr.mxu0 0.0
    %135 = vmatpush2.msra.mxu0 0.0
    %136 = vmatprep.subr.mxu0 0.0
    %137 = vmatpush2.msra.mxu0 0.0
    %138 = vmatprep.mubr.f32.mxu0 0.0
    %139 = vmatmul.mubr.f32.gmra.mxu0 %v48
    %v140 = vpop.f32.mrf.mxu0
    %v141 = vadd.f32 %v72, %v140
    %v142 = vpop.f32.mrf.mxu0
    %143 = vmatprep.mubr.f32.mxu0 0.0
    %144 = vmatmul.mubr.f32.gmra.mxu0 %v49
    %v145 = vpop.f32.mrf.mxu0
    %v146 = vadd.f32 %v72, %v145
    %v147 = vpop.f32.mrf.mxu0
    %148 = vmatprep.mubr.f32.mxu0 0.0
    %149 = vmatmul.mubr.f32.gmra.mxu0 %v50
    %v150 = vpop.f32.mrf.mxu0
    %v151 = vadd.f32 %v72, %v150
    %v152 = vpop.f32.mrf.mxu0
    %153 = vdwg.mxu0
    %v154 = vmax.f32 %v141, 0.0
    %v155 = vmax.f32 %v146, 0.0
    %v156 = vmax.f32 %v151, 0.0
    %v157 = vld [vmem:[#allocation4] sm:$0xff]
    %v158 = vld [vmem:[#allocation4 + $0x8] sm:$0xff]
    %v159 = vld [vmem:[#allocation4 + $0x10] sm:$0xff]
    %v160 = vld [vmem:[#allocation4 + $0x18] sm:$0xff]
    %v161 = vld [vmem:[#allocation4 + $0x20] sm:$0xff]
    %v162 = vld [vmem:[#allocation4 + $0x28] sm:$0xff]
    %v163 = vld [vmem:[#allocation4 + $0x30] sm:$0xff]
    %v164 = vld [vmem:[#allocation4 + $0x38] sm:$0xff]
    %v165 = vld [vmem:[#allocation4 + $0x40] sm:$0xff]
    %v166 = vld [vmem:[#allocation4 + $0x48] sm:$0xff]
    %v167 = vld [vmem:[#allocation4 + $0x50] sm:$0xff]
    %v168 = vld [vmem:[#allocation4 + $0x58] sm:$0xff]
    %v169 = vld [vmem:[#allocation4 + $0x60] sm:$0xff]
    %v170 = vld [vmem:[#allocation4 + $0x68] sm:$0xff]
    %v171 = vld [vmem:[#allocation4 + $0x70] sm:$0xff]
    %v172 = vld [vmem:[#allocation4 + $0x78] sm:$0xff]
    %v173 = vld [vmem:[%s4] sm:$0x1]
    %v175 = vlaneseq
    %v176 = vshrl.u32 %v175, 7
    %v177 = vsub.s32 0, %v176
    %v178 = vrot.slane %v173, %v177
    %180 = vmatprep.subr.mxu0 0.0
    %181 = vmatpush1.msra.mxu0 %v172
    %182 = vmatprep.subr.mxu0 0.0
    %183 = vmatpush1.msra.mxu0 %v171
    %184 = vmatprep.subr.mxu0 0.0
    %185 = vmatpush1.msra.mxu0 %v170
    %186 = vmatprep.subr.mxu0 0.0
    %187 = vmatpush1.msra.mxu0 %v169
    %188 = vmatprep.subr.mxu0 0.0
    %189 = vmatpush1.msra.mxu0 %v168
    %190 = vmatprep.subr.mxu0 0.0
    %191 = vmatpush1.msra.mxu0 %v167
    %192 = vmatprep.subr.mxu0 0.0
    %193 = vmatpush1.msra.mxu0 %v166
    %194 = vmatprep.subr.mxu0 0.0
    %195 = vmatpush1.msra.mxu0 %v165
    %196 = vmatprep.subr.mxu0 0.0
    %197 = vmatpush1.msra.mxu0 %v164
    %198 = vmatprep.subr.mxu0 0.0
    %199 = vmatpush1.msra.mxu0 %v163
    %200 = vmatprep.subr.mxu0 0.0
    %201 = vmatpush1.msra.mxu0 %v162
    %202 = vmatprep.subr.mxu0 0.0
    %203 = vmatpush1.msra.mxu0 %v161
    %204 = vmatprep.subr.mxu0 0.0
    %205 = vmatpush1.msra.mxu0 %v160
    %206 = vmatprep.subr.mxu0 0.0
    %207 = vmatpush1.msra.mxu0 %v159
    %208 = vmatprep.subr.mxu0 0.0
    %209 = vmatpush1.msra.mxu0 %v158
    %210 = vmatprep.subr.mxu0 0.0
    %211 = vmatpush1.msra.mxu0 %v157
    %212 = vmatprep.subr.mxu0 0.0
    %213 = vmatpush2.msra.mxu0 0.0
    %214 = vmatprep.subr.mxu0 0.0
    %215 = vmatpush2.msra.mxu0 0.0
    %216 = vmatprep.subr.mxu0 0.0
    %217 = vmatpush2.msra.mxu0 0.0
    %218 = vmatprep.subr.mxu0 0.0
    %219 = vmatpush2.msra.mxu0 0.0
    %220 = vmatprep.subr.mxu0 0.0
    %221 = vmatpush2.msra.mxu0 0.0
    %222 = vmatprep.subr.mxu0 0.0
    %223 = vmatpush2.msra.mxu0 0.0
    %224 = vmatprep.subr.mxu0 0.0
    %225 = vmatpush2.msra.mxu0 0.0
    %226 = vmatprep.subr.mxu0 0.0
    %227 = vmatpush2.msra.mxu0 0.0
    %228 = vmatprep.subr.mxu0 0.0
    %229 = vmatpush2.msra.mxu0 0.0
    %230 = vmatprep.subr.mxu0 0.0
    %231 = vmatpush2.msra.mxu0 0.0
    %232 = vmatprep.subr.mxu0 0.0
    %233 = vmatpush2.msra.mxu0 0.0
    %234 = vmatprep.subr.mxu0 0.0
    %235 = vmatpush2.msra.mxu0 0.0
    %236 = vmatprep.subr.mxu0 0.0
    %237 = vmatpush2.msra.mxu0 0.0
    %238 = vmatprep.subr.mxu0 0.0
    %239 = vmatpush2.msra.mxu0 0.0
    %240 = vmatprep.subr.mxu0 0.0
    %241 = vmatpush2.msra.mxu0 0.0
    %242 = vmatprep.subr.mxu0 0.0
    %243 = vmatpush2.msra.mxu0 0.0
    %244 = vmatprep.mubr.f32.mxu0 0.0
    %245 = vmatmul.mubr.f32.gmra.mxu0 %v154
    %v246 = vpop.f32.mrf.mxu0
    %v247 = vadd.f32 %v178, %v246
    %v248 = vpop.f32.mrf.mxu0
    %249 = vmatprep.mubr.f32.mxu0 0.0
    %250 = vmatmul.mubr.f32.gmra.mxu0 %v155
    %v251 = vpop.f32.mrf.mxu0
    %v252 = vadd.f32 %v178, %v251
    %v253 = vpop.f32.mrf.mxu0
    %254 = vmatprep.mubr.f32.mxu0 0.0
    %255 = vmatmul.mubr.f32.gmra.mxu0 %v156
    %v256 = vpop.f32.mrf.mxu0
    %v257 = vadd.f32 %v178, %v256
    %v258 = vpop.f32.mrf.mxu0
    %259 = vdwg.mxu0
    %vm260 = vcmp.gt.f32.partialorder %v247, 0.01
    %vm261 = vcmp.gt.f32.partialorder %v252, 0.01
    %vm262 = vcmp.gt.f32.partialorder %v257, 0.01
    %v263 = vsub.f32 %v247, 0.01
    %v264 = vsub.f32 %v252, 0.01
    %v265 = vsub.f32 %v257, 0.01
    %vm266 = vcmp.lt.f32.partialorder %v247, -0.01
    %vm267 = vcmp.lt.f32.partialorder %v252, -0.01
    %vm268 = vcmp.lt.f32.partialorder %v257, -0.01
    %v269 = vadd.f32 %v247, 0.01
    %v270 = vadd.f32 %v252, 0.01
    %v271 = vadd.f32 %v257, 0.01
    %v272 = vsel %vm266, %v269, 0.0
    %v273 = vsel %vm267, %v270, 0.0
    %v274 = vsel %vm268, %v271, 0.0
    %v275 = vsel %vm260, %v263, %v272
    %v276 = vsel %vm261, %v264, %v273
    %v277 = vsel %vm262, %v265, %v274
    %278 = vst [vmem:[%s5] sm:$0xff] %v275
    %279 = vst [vmem:[%s5 + $0x8] sm:$0xff] %v276
    %280 = vst [vmem:[%s5 + $0x10] sm:$0xff] %v277
    // Predicated region
    $region30: #{tpu_custom_call.1} parent=1 // pred_check
      _
    $region31: #{tpu_custom_call.1} parent=1 // pred_check_branch
      %282 = sbr.rel (0) target = $region33
    $region32: #{tpu_custom_call.1} parent=1 // pred_region
      _
    $region33: #{tpu_custom_call.1} parent=1 // pred_fallthru
      _
    // Predicated region
    $region34: #{tpu_custom_call.1} parent=1 // pred_check
      _
    $region35: #{tpu_custom_call.1} parent=1 // pred_check_branch
      %284 = sbr.rel (0) target = $region37
    $region36: #{tpu_custom_call.1} parent=1 // pred_region
      _
    $region37: #{tpu_custom_call.1} parent=1 // pred_fallthru
      _
    %285 = vsyncpa [#allocation3], 1
    %286 = vsyncpa [#allocation5], 1

</llo_original>
